<compile_context>
chip_gen: v6e
topology: v6e:2x2x1
jax: 0.10.0
libtpu: 0.0.40
codegen_flags: <defaults>
</compile_context>

<pallas_src>
import jax
import jax.numpy as jnp
from jax.experimental import pallas as pl
from jax.experimental.pallas import tpu as pltpu


def _logistic_kernel(w_ref, b_ref, x_ref, o_ref):
    # w_ref, b_ref: (1,) f32 scalars in SMEM (two sld's, no padded VMEM tile).
    # x_ref, o_ref: (block_rows, lanes) f32 lane-dense VMEM tiles.
    w = w_ref[0]
    b = b_ref[0]
    # Linear(1, 1) == scalar fused multiply-add on the VPU.
    z = x_ref[...] * w + b
    # Exact sigmoid: exp on the EUP, exact divide on the VPU. Handles the
    # exp(-z) -> inf case correctly (1 / inf == 0) and is fully hidden under
    # the HBM-bound pipeline.
    o_ref[...] = 1.0 / (1.0 + jnp.exp(-z))


def linear_module_forward(x, weight, bias, *, max_lanes=1024,
                          max_block_rows=1024, min_pallas_elems=1024):
    """Equivalent of LinearModule.forward: sigmoid(x @ W^T + b).

    x: (N, 1) float32, weight: (1, 1), bias: (1,). Returns (N, 1) float32.
    """
    orig_shape = x.shape
    assert x.shape[-1] == 1 and weight.shape == (1, 1) and bias.shape == (1,)

    x = x.astype(jnp.float32)
    w = weight.astype(jnp.float32)
    b = bias.astype(jnp.float32)
    n = x.size

    # Small-N fast path: launch + layout-plumbing overhead dominates; a single
    # fused XLA elementwise op is strictly faster for tiny batches.
    if n < min_pallas_elems:
        return jax.nn.sigmoid(x * w[0, 0] + b[0]).reshape(orig_shape)

    flat = x.reshape(-1)

    # Lane-dense slab: lanes a multiple of 128 -> full-width vld/vst (no
    # masked partial stores).
    lanes = min(max_lanes, pl.cdiv(n, 128) * 128)
    rows = pl.cdiv(n, lanes)

    # Pad only up to a multiple of `lanes` (never to grid*block*lanes).
    # When n is already lane-aligned: zero extra HBM passes in the wrapper.
    pad = rows * lanes - n
    if pad:
        flat = jnp.pad(flat, (0, pad))
    x2d = flat.reshape(rows, lanes)

    if rows <= 8:
        # Single full-extent block (block_shape == array dims is allowed).
        block_rows = rows
    else:
        # Guarantee >= 2 grid steps so the "parallel" axis shards across both
        # v7x TensorCores; cap at max_block_rows (4 MiB f32 at 1024x1024).
        block_rows = min(max_block_rows, pl.cdiv(pl.cdiv(rows, 2), 8) * 8)
    grid_rows = pl.cdiv(rows, block_rows)

    w_s = w.reshape(1)
    b_s = b.reshape(1)

    out2d = pl.pallas_call(
        _logistic_kernel,
        out_shape=jax.ShapeDtypeStruct((rows, lanes), jnp.float32),
        grid_spec=pltpu.PrefetchScalarGridSpec(
            num_scalar_prefetch=0,
            grid=(grid_rows,),
            in_specs=[
                pl.BlockSpec(memory_space=pltpu.SMEM),            # weight scalar
                pl.BlockSpec(memory_space=pltpu.SMEM),            # bias scalar
                pl.BlockSpec((block_rows, lanes), lambda i: (i, 0)),
            ],
            out_specs=pl.BlockSpec((block_rows, lanes), lambda i: (i, 0)),
        ),
        compiler_params=pltpu.CompilerParams(
            dimension_semantics=("parallel",),
            # Double-buffered 4 MiB in + out blocks = 16 MiB resident; 32 MiB
            # covers all generations (v5e default is only 16 MiB) and stays
            # well under v7x's 64 MiB physical VMEM.
            vmem_limit_bytes=32 * 1024 * 1024,
        ),
    )(w_s, b_s, x2d)

    out_flat = out2d.reshape(-1)
    if pad:
        out_flat = out_flat[:n]
    return out_flat.reshape(orig_shape)


if __name__ == "__main__":
    key = jax.random.PRNGKey(0)
    kx, kw, kb, kx2, kx3 = jax.random.split(key, 5)

    # nn.Linear(1, 1) parameters: weight (1, 1), bias (1,)
    weight = jax.random.uniform(kw, (1, 1), jnp.float32, minval=-1.0, maxval=1.0)
    bias = jax.random.uniform(kb, (1,), jnp.float32, minval=-1.0, maxval=1.0)

    def reference(xv):
        return jax.nn.sigmoid(xv @ weight.T + bias)

    # (a) Tiny batch (typical LinearModule usage) -> small-N fast path.
    x_small = jax.random.normal(kx, (8, 1), dtype=jnp.float32)
    y_small = jax.block_until_ready(linear_module_forward(x_small, weight, bias))
    # Mirrors the module's `print('data:', y_pred)` side effect (host-side).
    print("data:", y_small)
    assert y_small.shape == x_small.shape
    assert jnp.allclose(y_small, reference(x_small), atol=1e-5, rtol=1e-5)

    # (b) Kernel path: lane-aligned N (zero pad / zero slice), >= 2 grid steps.
    x_big = jax.random.normal(kx2, (16384, 1), dtype=jnp.float32)
    y_big = jax.block_until_ready(linear_module_forward(x_big, weight, bias))
    assert y_big.shape == x_big.shape
    assert jnp.allclose(y_big, reference(x_big), atol=1e-5, rtol=1e-5)

    # (c) Kernel path with non-aligned N (exercises the pad / tail-slice path).
    x_odd = jax.random.normal(kx3, (5000, 1), dtype=jnp.float32)
    y_odd = jax.block_until_ready(linear_module_forward(x_odd, weight, bias))
    assert y_odd.shape == x_odd.shape
    assert jnp.allclose(y_odd, reference(x_odd), atol=1e-5, rtol=1e-5)

    print("KERNEL_OK")
</pallas_src>

<mosaic_0001>
module attributes {stable_mosaic.version = 11 : i64} {
  func.func @_logistic_kernel(%arg0: i32, %arg1: memref<1xf32, #tpu.memory_space<smem>>, %arg2: memref<1xf32, #tpu.memory_space<smem>>, %arg3: memref<8x1024xf32, #tpu.memory_space<vmem>>, %arg4: memref<8x1024xf32, #tpu.memory_space<vmem>>) attributes {dimension_semantics = [#tpu.dimension_semantics<parallel>], iteration_bounds = array<i64: 2>, scalar_prefetch = 0 : i64, scratch_operands = 0 : i64, tpu.core_type = #tpu.core_type<tc>, window_params = [{transform_indices = @transform_0, window_bounds = array<i64: 1>}, {transform_indices = @transform_1, window_bounds = array<i64: 1>}, {transform_indices = @transform_2, window_bounds = array<i64: 8, 1024>}, {transform_indices = @transform_3, window_bounds = array<i64: 8, 1024>}]} {
    %c0 = arith.constant 0 : index
    %0 = memref.load %arg1[%c0] : memref<1xf32, #tpu.memory_space<smem>>
    %c0_0 = arith.constant 0 : index
    %1 = memref.load %arg2[%c0_0] : memref<1xf32, #tpu.memory_space<smem>>
    %c0_1 = arith.constant 0 : index
    %c0_2 = arith.constant 0 : index
    %2 = vector.load %arg3[%c0_1, %c0_2] : memref<8x1024xf32, #tpu.memory_space<vmem>>, vector<8x1024xf32>
    %3 = vector.broadcast %0 : f32 to vector<8x1024xf32>
    %4 = arith.mulf %2, %3 : vector<8x1024xf32>
    %5 = vector.broadcast %1 : f32 to vector<8x1024xf32>
    %6 = arith.addf %4, %5 : vector<8x1024xf32>
    %cst = arith.constant 0.000000e+00 : f32
    %7 = vector.broadcast %cst : f32 to vector<8x1024xf32>
    %8 = arith.subf %7, %6 : vector<8x1024xf32>
    %9 = math.exp %8 : vector<8x1024xf32>
    %cst_3 = arith.constant 1.000000e+00 : f32
    %10 = vector.broadcast %cst_3 : f32 to vector<8x1024xf32>
    %11 = arith.addf %10, %9 : vector<8x1024xf32>
    %cst_4 = arith.constant 1.000000e+00 : f32
    %12 = vector.broadcast %cst_4 : f32 to vector<8x1024xf32>
    %13 = arith.divf %12, %11 : vector<8x1024xf32>
    %c0_5 = arith.constant 0 : index
    %c0_6 = arith.constant 0 : index
    %14 = vector.load %arg4[%c0_5, %c0_6] : memref<8x1024xf32, #tpu.memory_space<vmem>>, vector<8x1024xf32>
    tpu.vector_store %arg4[%c0_5, %c0_6], %13 {strides = array<i32>} : memref<8x1024xf32, #tpu.memory_space<vmem>>, vector<8x1024xf32>,
    return
  }
  func.func @transform_0(%arg0: i32) -> i32 {
    %c0_i32 = arith.constant 0 : i32
    %c0_i32_0 = arith.constant 0 : i32
    return %c0_i32 : i32
  }
  func.func @transform_1(%arg0: i32) -> i32 {
    %c0_i32 = arith.constant 0 : i32
    %c0_i32_0 = arith.constant 0 : i32
    return %c0_i32 : i32
  }
  func.func @transform_2(%arg0: i32) -> (i32, i32) {
    %c0_i32 = arith.constant 0 : i32
    %c0_i32_0 = arith.constant 0 : i32
    return %arg0, %c0_i32 : i32, i32
  }
  func.func @transform_3(%arg0: i32) -> (i32, i32) {
    %c0_i32 = arith.constant 0 : i32
    %c0_i32_0 = arith.constant 0 : i32
    return %arg0, %c0_i32 : i32, i32
  }
}

</mosaic_0001>

<llo_original>
// kernel: tpu_custom_call.1
$region0: #{tpu_custom_call.1}
  #allocation0 [shape = 'u32[]', space=smem, size = 0x4, offset = 0x4, fixed_abs, tag = 'smem constant byte address 0x4 - core index']
  #allocation1 [shape = 'u32[144,128]{1,0:T(1,128)}', space=vmem, size = 0x12000, scoped, tag = 'internal scratch']
  #allocation2 [shape = 'f32[1]{0:T(128)S(6)}', space=smem, size = 0x200, scoped, tag = 'scoped memory for tpu_custom_call.1']
  #allocation3 [shape = 'f32[1]{0:T(128)S(6)}', space=smem, size = 0x200, scoped, tag = 'scoped memory for tpu_custom_call.1']
  %s0 = inlined_call_operand.<no memory space> [shape: f32[1], index: 0, kind: input, shape index: {}]
  %s1 = inlined_call_operand.<no memory space> [shape: f32[1], index: 1, kind: input, shape index: {}]
  %s2 = inlined_call_operand.hbm [shape: f32[16,1024], index: 2, kind: input, shape index: {}]
  %s3 = inlined_call_operand.hbm [shape: f32[16,1024], index: 3, kind: output, shape index: {}]
  %s4 = sld [smem:[#allocation0]]
  $region49: #{tpu_custom_call.1} parent=0
    _
  %s6 = ssub.s32 1, %s4
  %s7 = scalar_select 0, %s6, %s4
  %8 = sst [smem:[#allocation2]] %s0
  %9 = sst [smem:[#allocation3]] %s1
  $region1: #{tpu_custom_call.1} parent=0
    #allocation4 [shape = 'u8[65536]{0}', space=vmem, size = 0x10000, scoped, tag = 'input window, operand 2']
    #allocation5 [shape = 's32[2]{0}', space=sflag, size = 0x8, scoped, tag = 'scoped memory for tpu_custom_call.1']
    #allocation6 [shape = 's32[2]{0}', space=sflag, size = 0x8, scoped, tag = 'scoped memory for tpu_custom_call.1']
    #allocation7 [shape = 'u8[65536]{0}', space=vmem, size = 0x10000, scoped, tag = 'output window, operand 0']
    %10 = vsyncpa [#allocation5], 0
    %s11 = scalar_lea.sflag [#allocation5], 1
    %12 = vsyncpa %s11, 0
    %13 = vsyncpa [#allocation6], 0
    %s14 = scalar_lea.sflag [#allocation6], 1
    %15 = vsyncpa %s14, 0
    loop: start=0, step=1, limit=4
    $region2: #{tpu_custom_call.1} parent=1 // loop_pre_header
      _
    $region3: #{tpu_custom_call.1} parent=1 // loop_header
      %s17 = sphi 0, %s21
      %p18 = scmp.ge.s32.totalorder %s17, 4
      %s25 = sphi 0, %s25
      %s27 = sphi 0, %s25
      %s28 = sphi 0, %s27
      %s42 = sphi 0, %s28
      %s46 = sphi 0, %s46
      %s48 = sphi 0, %s46
      %s49 = sphi 0, %s48
      %s63 = sphi 0, %s49
      %s69 = sphi 0, %s71
      %s72 = sphi 0, %s69
      %s73 = sphi 0, %s72
      %s89 = sphi 0, %s73
      %s95 = sphi 0, %s97
      %s98 = sphi 0, %s95
      %s99 = sphi 0, %s98
      %s115 = sphi 0, %s99
    $region4: #{tpu_custom_call.1} parent=1 // loop_header_branch
      %20 = sbr.rel (%p18) target = $region8
    $region5: #{tpu_custom_call.1} parent=1 // loop_body
      %s22 = ssub.s32 %s17, 1
      %s23 = ssub.s32 %s17, 2
      %s24 = sadd.s32 %s17, 1
      %s26 = sadd.s32 %s25, 1
      %p29 = scmp.eq.s32.totalorder %s17, 1
      %p30 = scmp.ne.s32.totalorder %s25, %s27
      %p31 = scmp.eq.s32.totalorder %s17, 0
      %p32 = por %p30, %p31
      %p33 = scmp.ne.s32.totalorder %s25, %s27
      %p34 = scmp.eq.s32.totalorder %s22, 1
      %p35 = por %p33, %p34
      %p36 = scmp.ne.s32.totalorder %s27, %s28
      %p37 = scmp.eq.s32.totalorder %s22, 0
      %p38 = por %p36, %p37
      %p39 = scmp.ne.s32.totalorder %s27, %s28
      %p40 = scmp.eq.s32.totalorder %s23, 1
      %p41 = por %p39, %p40
      %p43 = scmp.ne.s32.totalorder %s28, %s42
      %p44 = scmp.eq.s32.totalorder %s23, 0
      %p45 = por %p43, %p44
      %s47 = sadd.s32 %s46, 1
      %p50 = scmp.eq.s32.totalorder %s17, 1
      %p51 = scmp.ne.s32.totalorder %s46, %s48
      %p52 = scmp.eq.s32.totalorder %s17, 0
      %p53 = por %p51, %p52
      %p54 = scmp.ne.s32.totalorder %s46, %s48
      %p55 = scmp.eq.s32.totalorder %s22, 1
      %p56 = por %p54, %p55
      %p57 = scmp.ne.s32.totalorder %s48, %s49
      %p58 = scmp.eq.s32.totalorder %s22, 0
      %p59 = por %p57, %p58
      %p60 = scmp.ne.s32.totalorder %s48, %s49
      %p61 = scmp.eq.s32.totalorder %s23, 1
      %p62 = por %p60, %p61
      %p64 = scmp.ne.s32.totalorder %s49, %s63
      %p65 = scmp.eq.s32.totalorder %s23, 0
      %p66 = por %p64, %p65
      %s67 = ssub.s32 %s17, %s24
      %p68 = scmp.eq.s32.totalorder %s67, 0
      %s70 = sadd.s32 %s69, 1
      %s71 = scalar_select %p68, %s69, %s70
      %p74 = pneg %p68
      %p75 = scmp.eq.s32.totalorder %s17, 1
      %p76 = por %p74, %p75
      %p77 = scmp.ne.s32.totalorder %s69, %s72
      %p78 = scmp.eq.s32.totalorder %s17, 0
      %p79 = por %p77, %p78
      %p80 = scmp.ne.s32.totalorder %s69, %s72
      %p81 = scmp.eq.s32.totalorder %s22, 1
      %p82 = por %p80, %p81
      %p83 = scmp.ne.s32.totalorder %s72, %s73
      %p84 = scmp.eq.s32.totalorder %s22, 0
      %p85 = por %p83, %p84
      %p86 = scmp.ne.s32.totalorder %s72, %s73
      %p87 = scmp.eq.s32.totalorder %s23, 1
      %p88 = por %p86, %p87
      %p90 = scmp.ne.s32.totalorder %s73, %s89
      %p91 = scmp.eq.s32.totalorder %s23, 0
      %p92 = por %p90, %p91
      %s93 = ssub.s32 %s17, %s24
      %p94 = scmp.eq.s32.totalorder %s93, 0
      %s96 = sadd.s32 %s95, 1
      %s97 = scalar_select %p94, %s95, %s96
      %p100 = pneg %p94
      %p101 = scmp.eq.s32.totalorder %s17, 1
      %p102 = por %p100, %p101
      %p103 = scmp.ne.s32.totalorder %s95, %s98
      %p104 = scmp.eq.s32.totalorder %s17, 0
      %p105 = por %p103, %p104
      %p106 = scmp.ne.s32.totalorder %s95, %s98
      %p107 = scmp.eq.s32.totalorder %s22, 1
      %p108 = por %p106, %p107
      %p109 = scmp.ne.s32.totalorder %s98, %s99
      %p110 = scmp.eq.s32.totalorder %s22, 0
      %p111 = por %p109, %p110
      %p112 = scmp.ne.s32.totalorder %s98, %s99
      %p113 = scmp.eq.s32.totalorder %s23, 1
      %p114 = por %p112, %p113
      %p116 = scmp.ne.s32.totalorder %s99, %s115
      %p117 = scmp.eq.s32.totalorder %s23, 0
      %p118 = por %p116, %p117
      %p119 = scmp.le.s32.totalorder 1, %s17
      %p120 = scmp.lt.s32.totalorder %s17, 3
      %p121 = pnand %p119, %p120
      %p122 = pneg %p121
      // Predicated region
      $region9: #{tpu_custom_call.1} parent=5 // pred_check
        _
      $region10: #{tpu_custom_call.1} parent=5 // pred_check_branch
        %124 = sbr.rel (%p121) target = $region12
      $region11: #{tpu_custom_call.1} parent=5 // pred_region
        %s125 = ssub.s32 %s17, 1
        // Predicated region
        $region13: #{tpu_custom_call.1} parent=11 // pred_check
          %p126 = pneg %p38
        $region14: #{tpu_custom_call.1} parent=11 // pred_check_branch
          %128 = sbr.rel (%p126) target = $region16
        $region15: #{tpu_custom_call.1} parent=11 // pred_region
          _
        $region16: #{tpu_custom_call.1} parent=11 // pred_fallthru
          _
        // Predicated region
        $region17: #{tpu_custom_call.1} parent=11 // pred_check
          %p129 = pneg %p59
        $region18: #{tpu_custom_call.1} parent=11 // pred_check_branch
          %131 = sbr.rel (%p129) target = $region20
        $region19: #{tpu_custom_call.1} parent=11 // pred_region
          _
        $region20: #{tpu_custom_call.1} parent=11 // pred_fallthru
          _
      $region12: #{tpu_custom_call.1} parent=5 // pred_fallthru
        _
      %p132 = scmp.lt.s32.totalorder %s17, 2
      // Predicated region
      $region21: #{tpu_custom_call.1} parent=5 // pred_check
        %p133 = pneg %p132
      $region22: #{tpu_custom_call.1} parent=5 // pred_check_branch
        %135 = sbr.rel (%p133) target = $region24
      $region23: #{tpu_custom_call.1} parent=5 // pred_region
        // Predicated region
        $region25: #{tpu_custom_call.1} parent=23 // pred_check
          %p136 = pneg %p79
        $region26: #{tpu_custom_call.1} parent=23 // pred_check_branch
          %138 = sbr.rel (%p136) target = $region28
        $region27: #{tpu_custom_call.1} parent=23 // pred_region
          %s139 = sand.u32 %s69, 1
          %s140 = scalar_lea.sflag [#allocation5], %s139
          %s141 = sand.u32 %s69, 1
          %s142 = smul.addr %s141, 64
          %s143 = scalar_lea.vmem [#allocation4], %s142
          %s145 = ssub.s32 1024, 1024
          %146 = vsyncadd %s140, %s145
          %s147 = smul.addr %s17, 8
          %s148 = smul.addr %s147, 128
          %s149 = scalar_lea.hbm %s2, %s148
          %s151 = sshll.u32 %s143, 4
          %s152 = int_to_ptr.vmem [resolvable:$true] %s151
          %154 = dma.hbm_to_vmem [thread:$0]  %s149, 1024, %s152, %s140
        $region28: #{tpu_custom_call.1} parent=23 // pred_fallthru
          _
      $region24: #{tpu_custom_call.1} parent=5 // pred_fallthru
        _
      %p155 = scmp.le.s32.totalorder 1, %s17
      %p156 = scmp.lt.s32.totalorder %s17, 3
      %p157 = pnand %p155, %p156
      %p158 = pneg %p157
      // Predicated region
      $region29: #{tpu_custom_call.1} parent=5 // pred_check
        _
      $region30: #{tpu_custom_call.1} parent=5 // pred_check_branch
        %160 = sbr.rel (%p157) target = $region32
      $region31: #{tpu_custom_call.1} parent=5 // pred_region
        %s161 = ssub.s32 %s17, 1
        %s162 = sand.u32 %s72, 1
        %s163 = scalar_lea.sflag [#allocation5], %s162
        %s164 = sand.u32 %s72, 1
        %s165 = smul.addr %s164, 64
        %s166 = scalar_lea.vmem [#allocation4], %s165
        // Predicated region
        $region33: #{tpu_custom_call.1} parent=31 // pred_check
          %p167 = pneg %p85
        $region34: #{tpu_custom_call.1} parent=31 // pred_check_branch
          %169 = sbr.rel (%p167) target = $region36
        $region35: #{tpu_custom_call.1} parent=31 // pred_region
          %170 = dma.done %s163, 1024
        $region36: #{tpu_custom_call.1} parent=31 // pred_fallthru
          _
        %p171 = pneg %p38
        %p172 = pneg %p35
        %p173 = pneg %p59
        %p174 = pneg %p56
        %s175 = sand.u32 %s72, 1
        %s176 = scalar_lea.sflag [#allocation5], %s175
        %s177 = sand.u32 %s72, 1
        %s178 = smul.addr %s177, 64
        %s179 = scalar_lea.vmem [#allocation4], %s178
        %p180 = pneg %p85
        %p181 = pneg %p82
        %p182 = pneg %p111
        %p183 = pneg %p108
        %s184 = sand.u32 %s98, 1
        %s185 = scalar_lea.sflag [#allocation6], %s184
        %s186 = sand.u32 %s98, 1
        %s187 = smul.addr %s186, 64
        %s188 = scalar_lea.vmem [#allocation7], %s187
        %s189 = sld [smem:[#allocation2]]
        %s190 = sld [smem:[#allocation3]]
        %v191 = vld [vmem:[%s166] sm:$0xff]
        %v192 = vld [vmem:[%s166 + $0x8] sm:$0xff]
        %v193 = vld [vmem:[%s166 + $0x10] sm:$0xff]
        %v194 = vld [vmem:[%s166 + $0x18] sm:$0xff]
        %v195 = vld [vmem:[%s166 + $0x20] sm:$0xff]
        %v196 = vld [vmem:[%s166 + $0x28] sm:$0xff]
        %v197 = vld [vmem:[%s166 + $0x30] sm:$0xff]
        %v198 = vld [vmem:[%s166 + $0x38] sm:$0xff]
        %v199 = vstv %s189
        %v200 = vmul.f32 %v191, %v199
        %v201 = vmul.f32 %v192, %v199
        %v202 = vmul.f32 %v193, %v199
        %v203 = vmul.f32 %v194, %v199
        %v204 = vmul.f32 %v195, %v199
        %v205 = vmul.f32 %v196, %v199
        %v206 = vmul.f32 %v197, %v199
        %v207 = vmul.f32 %v198, %v199
        %v208 = vstv %s190
        %v209 = vadd.f32 %v200, %v208
        %v210 = vadd.f32 %v201, %v208
        %v211 = vadd.f32 %v202, %v208
        %v212 = vadd.f32 %v203, %v208
        %v213 = vadd.f32 %v204, %v208
        %v214 = vadd.f32 %v205, %v208
        %v215 = vadd.f32 %v206, %v208
        %v216 = vadd.f32 %v207, %v208
        %v217 = vsub.f32 0.0, %v209
        %v218 = vsub.f32 0.0, %v210
        %v219 = vsub.f32 0.0, %v211
        %v220 = vsub.f32 0.0, %v212
        %v221 = vsub.f32 0.0, %v213
        %v222 = vsub.f32 0.0, %v214
        %v223 = vsub.f32 0.0, %v215
        %v224 = vsub.f32 0.0, %v216
        %v225 = vmul.f32 %v217, 1.442695
        %v226 = vpow.pop %v225
        %v227 = vmul.f32 %v218, 1.442695
        %v228 = vpow.pop %v227
        %v229 = vmul.f32 %v219, 1.442695
        %v230 = vpow.pop %v229
        %v231 = vmul.f32 %v220, 1.442695
        %v232 = vpow.pop %v231
        %v233 = vmul.f32 %v221, 1.442695
        %v234 = vpow.pop %v233
        %v235 = vmul.f32 %v222, 1.442695
        %v236 = vpow.pop %v235
        %v237 = vmul.f32 %v223, 1.442695
        %v238 = vpow.pop %v237
        %v239 = vmul.f32 %v224, 1.442695
        %v240 = vpow.pop %v239
        %v241 = vadd.f32 %v226, 1.0
        %v242 = vadd.f32 %v228, 1.0
        %v243 = vadd.f32 %v230, 1.0
        %v244 = vadd.f32 %v232, 1.0
        %v245 = vadd.f32 %v234, 1.0
        %v246 = vadd.f32 %v236, 1.0
        %v247 = vadd.f32 %v238, 1.0
        %v248 = vadd.f32 %v240, 1.0
        %v249 = vrcp.pop %v241
        %v250 = vmul.f32 1.0, %v249
        %v251 = vrcp.pop %v242
        %v252 = vmul.f32 1.0, %v251
        %v253 = vrcp.pop %v243
        %v254 = vmul.f32 1.0, %v253
        %v255 = vrcp.pop %v244
        %v256 = vmul.f32 1.0, %v255
        %v257 = vrcp.pop %v245
        %v258 = vmul.f32 1.0, %v257
        %v259 = vrcp.pop %v246
        %v260 = vmul.f32 1.0, %v259
        %v261 = vrcp.pop %v247
        %v262 = vmul.f32 1.0, %v261
        %v263 = vrcp.pop %v248
        %v264 = vmul.f32 1.0, %v263
        %265 = vst [vmem:[%s188] sm:$0xff] %v250
        %266 = vst [vmem:[%s188 + $0x8] sm:$0xff] %v252
        %267 = vst [vmem:[%s188 + $0x10] sm:$0xff] %v254
        %268 = vst [vmem:[%s188 + $0x18] sm:$0xff] %v256
        %269 = vst [vmem:[%s188 + $0x20] sm:$0xff] %v258
        %270 = vst [vmem:[%s188 + $0x28] sm:$0xff] %v260
        %271 = vst [vmem:[%s188 + $0x30] sm:$0xff] %v262
        %272 = vst [vmem:[%s188 + $0x38] sm:$0xff] %v264
        %s273 = sand.u32 %s98, 1
        %s274 = scalar_lea.sflag [#allocation6], %s273
        %s275 = sand.u32 %s98, 1
        %s276 = smul.addr %s275, 64
        %s277 = scalar_lea.vmem [#allocation7], %s276
        // Predicated region
        $region37: #{tpu_custom_call.1} parent=31 // pred_check
          %p278 = pneg %p108
        $region38: #{tpu_custom_call.1} parent=31 // pred_check_branch
          %280 = sbr.rel (%p278) target = $region40
        $region39: #{tpu_custom_call.1} parent=31 // pred_region
          %s282 = ssub.s32 1024, 1024
          %283 = vsyncadd %s274, %s282
          %s284 = smul.addr %s22, 8
          %s285 = smul.addr %s284, 128
          %s286 = scalar_lea.hbm %s3, %s285
          %s288 = sshll.u32 %s277, 4
          %s289 = int_to_ptr.vmem [resolvable:$true] %s288
          %291 = dma.vmem_to_hbm [thread:$0]  %s289, 1024, %s286, %s274
        $region40: #{tpu_custom_call.1} parent=31 // pred_fallthru
          _
      $region32: #{tpu_custom_call.1} parent=5 // pred_fallthru
        _
      %p292 = scmp.le.s32.totalorder 2, %s17
      // Predicated region
      $region41: #{tpu_custom_call.1} parent=5 // pred_check
        %p293 = pneg %p292
      $region42: #{tpu_custom_call.1} parent=5 // pred_check_branch
        %295 = sbr.rel (%p293) target = $region44
      $region43: #{tpu_custom_call.1} parent=5 // pred_region
        %s296 = ssub.s32 %s17, 2
        // Predicated region
        $region45: #{tpu_custom_call.1} parent=43 // pred_check
          %p297 = pneg %p114
        $region46: #{tpu_custom_call.1} parent=43 // pred_check_branch
          %299 = sbr.rel (%p297) target = $region48
        $region47: #{tpu_custom_call.1} parent=43 // pred_region
          %s300 = sand.u32 %s99, 1
          %s301 = scalar_lea.sflag [#allocation6], %s300
          %s302 = sand.u32 %s99, 1
          %s303 = smul.addr %s302, 64
          %s304 = scalar_lea.vmem [#allocation7], %s303
          %305 = dma.done %s301, 1024
        $region48: #{tpu_custom_call.1} parent=43 // pred_fallthru
          _
      $region44: #{tpu_custom_call.1} parent=5 // pred_fallthru
        _
    $region6: #{tpu_custom_call.1} parent=1 // loop_footer
      %s21 = sadd.s32 1, %s17
    $region7: #{tpu_custom_call.1} parent=1 // loop_footer_branch
      %16 = sbr.rel target = $region3
    $region8: #{tpu_custom_call.1} parent=1 // loop_exit
      _
    %306 = vsyncpa [#allocation5], 1
    %s307 = scalar_lea.sflag [#allocation5], 1
    %308 = vsyncpa %s307, 1
    %309 = vsyncpa [#allocation6], 1
    %s310 = scalar_lea.sflag [#allocation6], 1
    %311 = vsyncpa %s310, 1

</llo_original>
